<compile_context>
chip_gen: v5e
topology: v5e:2x2
jax: 0.10.0
libtpu: 0.0.40
codegen_flags: <defaults>
</compile_context>

<pallas_src>
import functools

import jax
import jax.numpy as jnp
from jax.experimental import pallas as pl
from jax.experimental.pallas import tpu as pltpu


def basic_block_kernel(H, x_ref, rin_ref, w1_ref, b1_ref, w2_ref, b2_ref, o_ref):
    """One row-tile (whole images) of the fused BasicBlock forward.

    x_ref   : (TR, L) f32    activations; TR = (images per tile) * H, L = W*C
    rin_ref : (TR, 1) i32    row index within its image (0..H-1)
    w*_ref  : (3L, L) bf16   block-banded conv weights with BN scale folded in;
                             rows [0:L)=ky0 (row above), [L:2L)=ky1, [2L:3L)=ky2
    b*_ref  : (1, L)  f32    folded BN bias, tiled across W
    o_ref   : (TR, L) f32    output
    """
    x = x_ref[...]
    TR = x.shape[0]

    rin = rin_ref[...]                 # (TR, 1) i32
    is_top = rin == 0                  # no in-image row above
    is_bot = rin == (H - 1)            # no in-image row below

    def conv3x3(v, w_ref):
        # ky taps via XLU sublane rolls + boundary masks.  The roll wraps at
        # the tile edge, but wrapped-in rows are exactly the masked ones, so
        # image boundaries inside the tile are respected.
        # TODO(synk): rolls are done on the f32 operand; rolling the bf16 copy
        # (single cast before the rolls) is a further micro-opt once packed
        # sublane rotates are verified on the target toolchain.
        up = jnp.where(is_top, 0.0, pltpu.roll(v, 1, axis=0))        # v[r-1]
        dn = jnp.where(is_bot, 0.0, pltpu.roll(v, TR - 1, axis=0))   # v[r+1]
        # One K=3L MXU matmul per conv: bf16 operands, f32 accumulation.
        vcat = jnp.concatenate([up, v, dn], axis=-1).astype(jnp.bfloat16)
        return jnp.dot(vcat, w_ref[...], preferred_element_type=jnp.float32)

    # conv1 -> bn1 (scale folded into weights, bias added here) -> relu
    h1 = jnp.maximum(conv3x3(x, w1_ref) + b1_ref[...], 0.0)
    # conv2 -> bn2 -> + identity -> relu   (all epilogue math in f32)
    o_ref[...] = jnp.maximum(conv3x3(h1, w2_ref) + b2_ref[...] + x, 0.0)


def _band_conv_weights(w_hwio, W):
    """Fold the kx (width) taps of a 3x3 conv into block-banded matrices.

    w_hwio: (3, 3, Cin, Cout) -> (3, W*Cin, W*Cout) with
      out[ky, wi*Cin+ci, wo*Cout+co] = w[ky, wi-wo+1, ci, co] if |wi-wo| <= 1 else 0
    so an (H, W*Cin) activation slab times this matrix performs the
    width/channel part of the convolution (zero padding along W included).
    """
    KH, KW, Cin, Cout = w_hwio.shape
    wi = jnp.arange(W)[:, None]
    wo = jnp.arange(W)[None, :]
    kx = wi - wo + (KW // 2)
    valid = (kx >= 0) & (kx < KW)
    kx = jnp.clip(kx, 0, KW - 1)
    blocks = w_hwio[:, kx, :, :]                                    # (KH, W, W, Cin, Cout)
    blocks = blocks * valid[None, :, :, None, None].astype(w_hwio.dtype)
    blocks = jnp.transpose(blocks, (0, 1, 3, 2, 4))                 # (KH, W, Cin, W, Cout)
    return blocks.reshape(KH, W * Cin, W * Cout)


def prepare_params(params, W):
    """One-time parameter prep (hoisted out of the per-forward path).

    Returns (wb1, b1, wb2, b2):
      wb*: (3*W*Cin, W*Cout) bf16 block-banded conv weights with the folded BN
           scale multiplied into the output columns.
      b* : (1, W*Cout) f32 folded BN bias, tiled across W.
    """
    w1, s1, b1, w2, s2, b2 = params

    def prep(w, s, b):
        wb = _band_conv_weights(w.astype(jnp.float32), W)           # (3, L, Lout) f32
        s_t = jnp.tile(s.reshape(-1).astype(jnp.float32), W)        # (Lout,)
        b_t = jnp.tile(b.reshape(-1).astype(jnp.float32), W).reshape(1, -1)
        wb = (wb * s_t[None, None, :]).reshape(wb.shape[0] * wb.shape[1], -1)
        return wb.astype(jnp.bfloat16), b_t

    wb1, b1f = prep(w1, s1, b1)
    wb2, b2f = prep(w2, s2, b2)
    return wb1, b1f, wb2, b2f


def _pick_row_tile(N, H, target_rows):
    """Whole images per tile; largest image count <= target_rows/H dividing N."""
    imgs = max(1, min(N, max(1, target_rows // H)))
    while N % imgs:
        imgs -= 1
    return imgs * H


def basic_block_forward(x_nchw, prepped, *, row_tile_target=512):
    """Pallas BasicBlock forward (stride=1, dilation=1, identity residual).

    x_nchw: (N, C, H, W) float32.  prepped: output of prepare_params.
    """
    wb1, b1f, wb2, b2f = prepped
    N, C, H, W = x_nchw.shape
    L = W * C          # lane dim (multiple of 128 here -> unmasked vst/vld)
    R = N * H          # fused-batch row dim
    assert wb1.shape == (3 * L, L) and wb2.shape == (3 * L, L), \
        "identity residual path requires in_planes == planes"

    # NCHW -> NHWC -> (N*H, W*C) lane-dense slab.
    x2d = jnp.transpose(x_nchw, (0, 2, 3, 1)).reshape(R, L).astype(jnp.float32)
    # Row-within-image index (O(R) i32; replaces the old O(R^2) shift matrices).
    rin = (jnp.arange(R, dtype=jnp.int32) % H).reshape(R, 1)

    # Row tiles hold whole images so the ky boundary masks stay tile-local.
    TR = _pick_row_tile(N, H, row_tile_target)
    grid = (R // TR,)

    # TODO(synk): for real ResNet channel counts (e.g. C=64, W=56) the (3L, L)
    # banded weights scale quadratically in W; rework the kx taps as lane rolls
    # feeding K=3C matmuls (9*C^2 weights) before scaling up, and re-budget the
    # row tile / VMEM per generation (<= ~48 MiB resident on v7x's 64 MiB).
    out2d = pl.pallas_call(
        functools.partial(basic_block_kernel, H),
        out_shape=jax.ShapeDtypeStruct((R, L), jnp.float32),
        grid_spec=pltpu.PrefetchScalarGridSpec(
            num_scalar_prefetch=0,
            grid=grid,
            in_specs=[
                pl.BlockSpec((TR, L), lambda i: (i, 0)),        # x row tile
                pl.BlockSpec((TR, 1), lambda i: (i, 0)),        # row-in-image idx
                pl.BlockSpec((3 * L, L), lambda i: (0, 0)),     # wb1 (pinned)
                pl.BlockSpec((1, L), lambda i: (0, 0)),         # b1
                pl.BlockSpec((3 * L, L), lambda i: (0, 0)),     # wb2 (pinned)
                pl.BlockSpec((1, L), lambda i: (0, 0)),         # b2
            ],
            out_specs=pl.BlockSpec((TR, L), lambda i: (i, 0)),
        ),
        compiler_params=pltpu.CompilerParams(
            dimension_semantics=("parallel",),          # row tiles independent
            vmem_limit_bytes=32 * 1024 * 1024,          # safe on all generations
        ),
    )(x2d, rin, wb1, b1f, wb2, b2f)

    return jnp.transpose(out2d.reshape(N, H, W, C), (0, 3, 1, 2))   # back to NCHW


def reference_forward(x_nchw, params):
    """Pure-JAX reference with the same numerics contract as the kernel
    (BN scale folded into bf16 conv weights, f32 accumulation; bias, residual
    and ReLU in f32)."""
    w1, s1, b1, w2, s2, b2 = params
    x = jnp.transpose(x_nchw, (0, 2, 3, 1)).astype(jnp.float32)
    dn = ('NHWC', 'HWIO', 'NHWC')

    def conv_bn(v, w, s):
        ws = (w * s.reshape(1, 1, 1, -1)).astype(jnp.bfloat16)
        return jax.lax.conv_general_dilated(
            v.astype(jnp.bfloat16), ws, (1, 1), 'SAME',
            dimension_numbers=dn, preferred_element_type=jnp.float32)

    h = jnp.maximum(conv_bn(x, w1, s1) + b1.reshape(1, 1, 1, -1), 0.0)
    h = conv_bn(h, w2, s2) + b2.reshape(1, 1, 1, -1)
    h = jnp.maximum(h + x, 0.0)
    return jnp.transpose(h, (0, 3, 1, 2))


if __name__ == "__main__":
    key = jax.random.PRNGKey(0)
    N, C, H, W = 2, 8, 16, 16       # in_planes = planes = 8  ->  W*C = 128 lanes
    planes = C
    keys = jax.random.split(key, 11)

    x = jax.random.normal(keys[0], (N, C, H, W), jnp.float32)

    # Conv weights: PyTorch OIHW, transposed to HWIO for the NHWC-style kernel.
    w1_oihw = 0.1 * jax.random.normal(keys[1], (planes, C, 3, 3), jnp.float32)
    w2_oihw = 0.1 * jax.random.normal(keys[2], (planes, planes, 3, 3), jnp.float32)
    w1 = jnp.transpose(w1_oihw, (2, 3, 1, 0))
    w2 = jnp.transpose(w2_oihw, (2, 3, 1, 0))

    def bn_affine(kg, kb, km, kv, c):
        # Deterministic synthetic BatchNorm parameters, folded to scale/bias.
        eps = 1e-5
        gamma = 1.0 + 0.1 * jax.random.normal(kg, (c,), jnp.float32)
        beta = 0.1 * jax.random.normal(kb, (c,), jnp.float32)
        mean = 0.1 * jax.random.normal(km, (c,), jnp.float32)
        var = jnp.abs(1.0 + 0.1 * jax.random.normal(kv, (c,), jnp.float32))
        scale = gamma / jnp.sqrt(var + eps)
        bias = beta - mean * scale
        return scale, bias

    s1, b1 = bn_affine(keys[3], keys[4], keys[5], keys[6], planes)
    s2, b2 = bn_affine(keys[7], keys[8], keys[9], keys[10], planes)

    params = (w1, s1, b1, w2, s2, b2)

    # One-time parameter prep (hoisted out of the per-forward path).
    prepped = prepare_params(params, W)
    prepped = jax.tree_util.tree_map(jax.block_until_ready, prepped)

    fwd = jax.jit(basic_block_forward)
    out = jax.block_until_ready(fwd(x, prepped))

    ref = reference_forward(x, params)
    assert out.shape == (N, C, H, W)
    # Same numerics contract in kernel and reference (bf16(w*scale) MXU
    # operands, f32 accumulation); residual differences are f32 reassociation.
    assert jnp.allclose(out, ref, rtol=1e-2, atol=1e-2), \
        float(jnp.max(jnp.abs(out - ref)))

    print("KERNEL_OK")
</pallas_src>

<mosaic_0001>
module attributes {stable_mosaic.version = 11 : i64} {
  func.func @basic_block_kernel(%arg0: i32, %arg1: memref<32x128xf32, #tpu.memory_space<vmem>>, %arg2: memref<32x1xi32, #tpu.memory_space<vmem>>, %arg3: memref<384x128xbf16, #tpu.memory_space<vmem>>, %arg4: memref<1x128xf32, #tpu.memory_space<vmem>>, %arg5: memref<384x128xbf16, #tpu.memory_space<vmem>>, %arg6: memref<1x128xf32, #tpu.memory_space<vmem>>, %arg7: memref<32x128xf32, #tpu.memory_space<vmem>>) attributes {dimension_semantics = [#tpu.dimension_semantics<parallel>], iteration_bounds = array<i64: 1>, scalar_prefetch = 0 : i64, scratch_operands = 0 : i64, tpu.core_type = #tpu.core_type<tc>, window_params = [{transform_indices = @transform_0, window_bounds = array<i64: 32, 128>}, {transform_indices = @transform_1, window_bounds = array<i64: 32, 1>}, {pipeline_mode = #tpu.pipeline_mode<synchronous>, transform_indices = @transform_2, window_bounds = array<i64: 384, 128>}, {pipeline_mode = #tpu.pipeline_mode<synchronous>, transform_indices = @transform_3, window_bounds = array<i64: 1, 128>}, {pipeline_mode = #tpu.pipeline_mode<synchronous>, transform_indices = @transform_4, window_bounds = array<i64: 384, 128>}, {pipeline_mode = #tpu.pipeline_mode<synchronous>, transform_indices = @transform_5, window_bounds = array<i64: 1, 128>}, {transform_indices = @transform_6, window_bounds = array<i64: 32, 128>}]} {
    %c0 = arith.constant 0 : index
    %c0_0 = arith.constant 0 : index
    %0 = vector.load %arg1[%c0, %c0_0] : memref<32x128xf32, #tpu.memory_space<vmem>>, vector<32x128xf32>
    %c0_1 = arith.constant 0 : index
    %c0_2 = arith.constant 0 : index
    %1 = vector.load %arg2[%c0_1, %c0_2] : memref<32x1xi32, #tpu.memory_space<vmem>>, vector<32x1xi32>
    %c0_i32 = arith.constant 0 : i32
    %2 = vector.broadcast %c0_i32 : i32 to vector<32x1xi32>
    %3 = arith.cmpi eq, %1, %2 : vector<32x1xi32>
    %c15_i32 = arith.constant 15 : i32
    %4 = vector.broadcast %c15_i32 : i32 to vector<32x1xi32>
    %5 = arith.cmpi eq, %1, %4 : vector<32x1xi32>
    %c1_i32 = arith.constant 1 : i32
    %6 = tpu.dynamic_rotate %0 by %c1_i32 dim 0 : vector<32x128xf32>, i32 -> vector<32x128xf32>
    %cst = arith.constant 0.000000e+00 : f32
    %7 = vector.shape_cast %3 : vector<32x1xi1> to vector<32x1xi1>
    %8 = vector.broadcast %7 : vector<32x1xi1> to vector<32x128xi1>
    %9 = vector.broadcast %cst : f32 to vector<32x128xf32>
    %10 = arith.select %8, %9, %6 : vector<32x128xi1>, vector<32x128xf32>
    %c31_i32 = arith.constant 31 : i32
    %11 = tpu.dynamic_rotate %0 by %c31_i32 dim 0 : vector<32x128xf32>, i32 -> vector<32x128xf32>
    %cst_3 = arith.constant 0.000000e+00 : f32
    %12 = vector.shape_cast %5 : vector<32x1xi1> to vector<32x1xi1>
    %13 = vector.broadcast %12 : vector<32x1xi1> to vector<32x128xi1>
    %14 = vector.broadcast %cst_3 : f32 to vector<32x128xf32>
    %15 = arith.select %13, %14, %11 : vector<32x128xi1>, vector<32x128xf32>
    %16 = tpu.concatenate %10, %0, %15 in 1 : vector<32x128xf32>, vector<32x128xf32>, vector<32x128xf32> -> vector<32x384xf32>
    %17 = arith.truncf %16 : vector<32x384xf32> to vector<32x384xbf16>
    %c0_4 = arith.constant 0 : index
    %c0_5 = arith.constant 0 : index
    %18 = vector.load %arg3[%c0_4, %c0_5] : memref<384x128xbf16, #tpu.memory_space<vmem>>, vector<384x128xbf16>
    %cst_6 = arith.constant dense<0.000000e+00> : vector<32x128xf32>
    %19 = tpu.matmul %17, %18, %cst_6 {dimension_numbers = #tpu.dot_dimension_numbers<[1], [0], [0], [1], [0, 0, 1, 1], [], []>} : vector<32x384xbf16>, vector<384x128xbf16>, vector<32x128xf32> -> vector<32x128xf32>
    %c0_7 = arith.constant 0 : index
    %c0_8 = arith.constant 0 : index
    %20 = vector.load %arg4[%c0_7, %c0_8] : memref<1x128xf32, #tpu.memory_space<vmem>>, vector<1x128xf32>
    %21 = vector.broadcast %20 : vector<1x128xf32> to vector<32x128xf32>
    %22 = arith.addf %19, %21 : vector<32x128xf32>
    %cst_9 = arith.constant 0.000000e+00 : f32
    %23 = vector.broadcast %cst_9 : f32 to vector<32x128xf32>
    %24 = arith.maximumf %22, %23 : vector<32x128xf32>
    %c1_i32_10 = arith.constant 1 : i32
    %25 = tpu.dynamic_rotate %24 by %c1_i32_10 dim 0 : vector<32x128xf32>, i32 -> vector<32x128xf32>
    %cst_11 = arith.constant 0.000000e+00 : f32
    %26 = vector.shape_cast %3 : vector<32x1xi1> to vector<32x1xi1>
    %27 = vector.broadcast %26 : vector<32x1xi1> to vector<32x128xi1>
    %28 = vector.broadcast %cst_11 : f32 to vector<32x128xf32>
    %29 = arith.select %27, %28, %25 : vector<32x128xi1>, vector<32x128xf32>
    %c31_i32_12 = arith.constant 31 : i32
    %30 = tpu.dynamic_rotate %24 by %c31_i32_12 dim 0 : vector<32x128xf32>, i32 -> vector<32x128xf32>
    %cst_13 = arith.constant 0.000000e+00 : f32
    %31 = vector.shape_cast %5 : vector<32x1xi1> to vector<32x1xi1>
    %32 = vector.broadcast %31 : vector<32x1xi1> to vector<32x128xi1>
    %33 = vector.broadcast %cst_13 : f32 to vector<32x128xf32>
    %34 = arith.select %32, %33, %30 : vector<32x128xi1>, vector<32x128xf32>
    %35 = tpu.concatenate %29, %24, %34 in 1 : vector<32x128xf32>, vector<32x128xf32>, vector<32x128xf32> -> vector<32x384xf32>
    %36 = arith.truncf %35 : vector<32x384xf32> to vector<32x384xbf16>
    %c0_14 = arith.constant 0 : index
    %c0_15 = arith.constant 0 : index
    %37 = vector.load %arg5[%c0_14, %c0_15] : memref<384x128xbf16, #tpu.memory_space<vmem>>, vector<384x128xbf16>
    %cst_16 = arith.constant dense<0.000000e+00> : vector<32x128xf32>
    %38 = tpu.matmul %36, %37, %cst_16 {dimension_numbers = #tpu.dot_dimension_numbers<[1], [0], [0], [1], [0, 0, 1, 1], [], []>} : vector<32x384xbf16>, vector<384x128xbf16>, vector<32x128xf32> -> vector<32x128xf32>
    %c0_17 = arith.constant 0 : index
    %c0_18 = arith.constant 0 : index
    %39 = vector.load %arg6[%c0_17, %c0_18] : memref<1x128xf32, #tpu.memory_space<vmem>>, vector<1x128xf32>
    %40 = vector.broadcast %39 : vector<1x128xf32> to vector<32x128xf32>
    %41 = arith.addf %38, %40 : vector<32x128xf32>
    %42 = arith.addf %41, %0 : vector<32x128xf32>
    %cst_19 = arith.constant 0.000000e+00 : f32
    %43 = vector.broadcast %cst_19 : f32 to vector<32x128xf32>
    %44 = arith.maximumf %42, %43 : vector<32x128xf32>
    %c0_20 = arith.constant 0 : index
    %c0_21 = arith.constant 0 : index
    %45 = vector.load %arg7[%c0_20, %c0_21] : memref<32x128xf32, #tpu.memory_space<vmem>>, vector<32x128xf32>
    tpu.vector_store %arg7[%c0_20, %c0_21], %44 {strides = array<i32>} : memref<32x128xf32, #tpu.memory_space<vmem>>, vector<32x128xf32>,
    return
  }
  func.func @transform_0(%arg0: i32) -> (i32, i32) {
    %c0_i32 = arith.constant 0 : i32
    %c0_i32_0 = arith.constant 0 : i32
    return %arg0, %c0_i32 : i32, i32
  }
  func.func @transform_1(%arg0: i32) -> (i32, i32) {
    %c0_i32 = arith.constant 0 : i32
    %c0_i32_0 = arith.constant 0 : i32
    return %arg0, %c0_i32 : i32, i32
  }
  func.func @transform_2(%arg0: i32) -> (i32, i32) {
    %c0_i32 = arith.constant 0 : i32
    %c0_i32_0 = arith.constant 0 : i32
    %c0_i32_1 = arith.constant 0 : i32
    return %c0_i32, %c0_i32_0 : i32, i32
  }
  func.func @transform_3(%arg0: i32) -> (i32, i32) {
    %c0_i32 = arith.constant 0 : i32
    %c0_i32_0 = arith.constant 0 : i32
    %c0_i32_1 = arith.constant 0 : i32
    return %c0_i32, %c0_i32_0 : i32, i32
  }
  func.func @transform_4(%arg0: i32) -> (i32, i32) {
    %c0_i32 = arith.constant 0 : i32
    %c0_i32_0 = arith.constant 0 : i32
    %c0_i32_1 = arith.constant 0 : i32
    return %c0_i32, %c0_i32_0 : i32, i32
  }
  func.func @transform_5(%arg0: i32) -> (i32, i32) {
    %c0_i32 = arith.constant 0 : i32
    %c0_i32_0 = arith.constant 0 : i32
    %c0_i32_1 = arith.constant 0 : i32
    return %c0_i32, %c0_i32_0 : i32, i32
  }
  func.func @transform_6(%arg0: i32) -> (i32, i32) {
    %c0_i32 = arith.constant 0 : i32
    %c0_i32_0 = arith.constant 0 : i32
    return %arg0, %c0_i32 : i32, i32
  }
}

</mosaic_0001>

<llo_original>
// kernel: basic_block_forward.1
$region0: #{basic_block_forward.1}
  #allocation0 [shape = 'u32[]', space=smem, size = 0x4, offset = 0x4, fixed_abs, tag = 'smem constant byte address 0x4 - core index']
  #allocation1 [shape = 'u32[72,128]{1,0:T(1,128)}', space=vmem, size = 0x9000, scoped, tag = 'internal scratch']
  %s0 = inlined_call_operand.vmem [shape: f32[32,128], index: 0, kind: input, shape index: {}]
  %s1 = inlined_call_operand.vmem [shape: s32[32,1], index: 1, kind: input, shape index: {}]
  %s2 = inlined_call_operand.vmem [shape: bf16[384,128], index: 2, kind: input, shape index: {}]
  %s3 = inlined_call_operand.vmem [shape: f32[1,128], index: 3, kind: input, shape index: {}]
  %s4 = inlined_call_operand.vmem [shape: bf16[384,128], index: 4, kind: input, shape index: {}]
  %s5 = inlined_call_operand.vmem [shape: f32[1,128], index: 5, kind: input, shape index: {}]
  %s6 = inlined_call_operand.vmem [shape: f32[32,128], index: 6, kind: output, shape index: {}]
  %s7 = sld [smem:[#allocation0]]
  $region34: #{basic_block_forward.1} parent=0
    _
  %s9 = ssub.s32 1, %s7
  %s10 = scalar_select 0, %s9, %s7
  // Predicated region
  $region2: #{basic_block_forward.1} parent=0 // pred_check
    _
  $region3: #{basic_block_forward.1} parent=0 // pred_check_branch
    %12 = sbr.rel (0) target = $region5
  $region4: #{basic_block_forward.1} parent=0 // pred_region
    _
  $region5: #{basic_block_forward.1} parent=0 // pred_fallthru
    _
  // Predicated region
  $region6: #{basic_block_forward.1} parent=0 // pred_check
    _
  $region7: #{basic_block_forward.1} parent=0 // pred_check_branch
    %14 = sbr.rel (0) target = $region9
  $region8: #{basic_block_forward.1} parent=0 // pred_region
    _
  $region9: #{basic_block_forward.1} parent=0 // pred_fallthru
    _
  // Predicated region
  $region10: #{basic_block_forward.1} parent=0 // pred_check
    _
  $region11: #{basic_block_forward.1} parent=0 // pred_check_branch
    %16 = sbr.rel (0) target = $region13
  $region12: #{basic_block_forward.1} parent=0 // pred_region
    _
  $region13: #{basic_block_forward.1} parent=0 // pred_fallthru
    _
  // Predicated region
  $region14: #{basic_block_forward.1} parent=0 // pred_check
    _
  $region15: #{basic_block_forward.1} parent=0 // pred_check_branch
    %18 = sbr.rel (0) target = $region17
  $region16: #{basic_block_forward.1} parent=0 // pred_region
    _
  $region17: #{basic_block_forward.1} parent=0 // pred_fallthru
    _
  // Predicated region
  $region18: #{basic_block_forward.1} parent=0 // pred_check
    _
  $region19: #{basic_block_forward.1} parent=0 // pred_check_branch
    %20 = sbr.rel (0) target = $region21
  $region20: #{basic_block_forward.1} parent=0 // pred_region
    _
  $region21: #{basic_block_forward.1} parent=0 // pred_fallthru
    _
  // Predicated region
  $region22: #{basic_block_forward.1} parent=0 // pred_check
    _
  $region23: #{basic_block_forward.1} parent=0 // pred_check_branch
    %22 = sbr.rel (0) target = $region25
  $region24: #{basic_block_forward.1} parent=0 // pred_region
    _
  $region25: #{basic_block_forward.1} parent=0 // pred_fallthru
    _
  %v23 = vld [vmem:[%s0] sm:$0xff]
  %v24 = vld [vmem:[%s0 + $0x8] sm:$0xff]
  %v25 = vld [vmem:[%s0 + $0x10] sm:$0xff]
  %v26 = vld [vmem:[%s0 + $0x18] sm:$0xff]
  %v27 = vld [vmem:[%s1] sm:$0xff]
  %v28 = vld [vmem:[%s1 + $0x8] sm:$0xff]
  %v29 = vld [vmem:[%s1 + $0x10] sm:$0xff]
  %v30 = vld [vmem:[%s1 + $0x18] sm:$0xff]
  %vm31 = vcmp.eq.s32.totalorder %v27, 0
  %vm32 = vcmp.eq.s32.totalorder %v28, 0
  %vm33 = vcmp.eq.s32.totalorder %v29, 0
  %vm34 = vcmp.eq.s32.totalorder %v30, 0
  %vm35 = vcmp.eq.s32.totalorder %v27, 15
  %vm36 = vcmp.eq.s32.totalorder %v28, 15
  %vm37 = vcmp.eq.s32.totalorder %v29, 15
  %vm38 = vcmp.eq.s32.totalorder %v30, 15
  %v39 = vrot.slane %v23, 7
  %v40 = vrot.slane %v24, 7
  %v41 = vrot.slane %v25, 7
  %v42 = vrot.slane %v26, 7
  %v43 = vlaneseq
  %v44 = vshrl.u32 %v43, 7
  %vm45 = vcmp.lt.s32.totalorder %v44, 1
  %v46 = vsel %vm45, %v41, %v42
  %v47 = vsel %vm45, %v40, %v41
  %v48 = vsel %vm45, %v39, %v40
  %v49 = vsel %vm45, %v42, %v39
  %v50 = vsel %vm31, 1, 0
  %v51 = vsel %vm32, 1, 0
  %v52 = vsel %vm33, 1, 0
  %v53 = vsel %vm34, 1, 0
  %54 = vset.pattern.permute.xlu0 0
  %55 = vperm.xlu0 %54, %v50
  %v56 = vpop.permute.xlu0 %55
  %57 = vset.pattern.permute.xlu0 0
  %58 = vperm.xlu0 %57, %v51
  %v59 = vpop.permute.xlu0 %58
  %60 = vset.pattern.permute.xlu0 0
  %61 = vperm.xlu0 %60, %v52
  %v62 = vpop.permute.xlu0 %61
  %63 = vset.pattern.permute.xlu0 0
  %64 = vperm.xlu0 %63, %v53
  %v65 = vpop.permute.xlu0 %64
  %vm66 = vcmp.eq.s32.totalorder %v56, 1
  %vm67 = vcmp.eq.s32.totalorder %v59, 1
  %vm68 = vcmp.eq.s32.totalorder %v62, 1
  %vm69 = vcmp.eq.s32.totalorder %v65, 1
  %v70 = vsel %vm66, 0.0, %v49
  %v71 = vsel %vm67, 0.0, %v48
  %v72 = vsel %vm68, 0.0, %v47
  %v73 = vsel %vm69, 0.0, %v46
  %v74 = vrot.slane %v23, 1
  %v75 = vrot.slane %v24, 1
  %v76 = vrot.slane %v25, 1
  %v77 = vrot.slane %v26, 1
  %vm78 = vcmp.lt.s32.totalorder %v44, 7
  %v79 = vsel %vm78, %v76, %v77
  %v80 = vsel %vm78, %v75, %v76
  %v81 = vsel %vm78, %v74, %v75
  %v82 = vsel %vm78, %v77, %v74
  %v83 = vsel %vm35, 1, 0
  %v84 = vsel %vm36, 1, 0
  %v85 = vsel %vm37, 1, 0
  %v86 = vsel %vm38, 1, 0
  %87 = vset.pattern.permute.xlu0 0
  %88 = vperm.xlu0 %87, %v83
  %v89 = vpop.permute.xlu0 %88
  %90 = vset.pattern.permute.xlu0 0
  %91 = vperm.xlu0 %90, %v84
  %v92 = vpop.permute.xlu0 %91
  %93 = vset.pattern.permute.xlu0 0
  %94 = vperm.xlu0 %93, %v85
  %v95 = vpop.permute.xlu0 %94
  %96 = vset.pattern.permute.xlu0 0
  %97 = vperm.xlu0 %96, %v86
  %v98 = vpop.permute.xlu0 %97
  %vm99 = vcmp.eq.s32.totalorder %v89, 1
  %vm100 = vcmp.eq.s32.totalorder %v92, 1
  %vm101 = vcmp.eq.s32.totalorder %v95, 1
  %vm102 = vcmp.eq.s32.totalorder %v98, 1
  %v103 = vsel %vm99, 0.0, %v81
  %v104 = vsel %vm100, 0.0, %v80
  %v105 = vsel %vm101, 0.0, %v79
  %v106 = vsel %vm102, 0.0, %v82
  %v107 = vpack.c.bf16 %v71, %v70
  %v108 = vpack.c.bf16 %v24, %v23
  %v109 = vpack.c.bf16 %v104, %v103
  %v110 = vpack.c.bf16 %v73, %v72
  %v111 = vpack.c.bf16 %v26, %v25
  %v112 = vpack.c.bf16 %v106, %v105
  %v113 = vld [vmem:[%s2] sm:$0xf]
  %v114 = vld [vmem:[%s2 + $0x4] sm:$0xf]
  %v115 = vld [vmem:[%s2 + $0x8] sm:$0xf]
  %v116 = vld [vmem:[%s2 + $0xc] sm:$0xf]
  %v117 = vld [vmem:[%s2 + $0x10] sm:$0xf]
  %v118 = vld [vmem:[%s2 + $0x14] sm:$0xf]
  %v119 = vld [vmem:[%s2 + $0x18] sm:$0xf]
  %v120 = vld [vmem:[%s2 + $0x1c] sm:$0xf]
  %v121 = vld [vmem:[%s2 + $0x20] sm:$0xf]
  %v122 = vld [vmem:[%s2 + $0x24] sm:$0xf]
  %v123 = vld [vmem:[%s2 + $0x28] sm:$0xf]
  %v124 = vld [vmem:[%s2 + $0x2c] sm:$0xf]
  %v125 = vld [vmem:[%s2 + $0x30] sm:$0xf]
  %v126 = vld [vmem:[%s2 + $0x34] sm:$0xf]
  %v127 = vld [vmem:[%s2 + $0x38] sm:$0xf]
  %v128 = vld [vmem:[%s2 + $0x3c] sm:$0xf]
  %v129 = vld [vmem:[%s2 + $0x40] sm:$0xf]
  %v130 = vld [vmem:[%s2 + $0x44] sm:$0xf]
  %v131 = vld [vmem:[%s2 + $0x48] sm:$0xf]
  %v132 = vld [vmem:[%s2 + $0x4c] sm:$0xf]
  %v133 = vld [vmem:[%s2 + $0x50] sm:$0xf]
  %v134 = vld [vmem:[%s2 + $0x54] sm:$0xf]
  %v135 = vld [vmem:[%s2 + $0x58] sm:$0xf]
  %v136 = vld [vmem:[%s2 + $0x5c] sm:$0xf]
  %v137 = vld [vmem:[%s2 + $0x60] sm:$0xf]
  %v138 = vld [vmem:[%s2 + $0x64] sm:$0xf]
  %v139 = vld [vmem:[%s2 + $0x68] sm:$0xf]
  %v140 = vld [vmem:[%s2 + $0x6c] sm:$0xf]
  %v141 = vld [vmem:[%s2 + $0x70] sm:$0xf]
  %v142 = vld [vmem:[%s2 + $0x74] sm:$0xf]
  %v143 = vld [vmem:[%s2 + $0x78] sm:$0xf]
  %v144 = vld [vmem:[%s2 + $0x7c] sm:$0xf]
  %v145 = vld [vmem:[%s2 + $0x80] sm:$0xf]
  %v146 = vld [vmem:[%s2 + $0x84] sm:$0xf]
  %v147 = vld [vmem:[%s2 + $0x88] sm:$0xf]
  %v148 = vld [vmem:[%s2 + $0x8c] sm:$0xf]
  %v149 = vld [vmem:[%s2 + $0x90] sm:$0xf]
  %v150 = vld [vmem:[%s2 + $0x94] sm:$0xf]
  %v151 = vld [vmem:[%s2 + $0x98] sm:$0xf]
  %v152 = vld [vmem:[%s2 + $0x9c] sm:$0xf]
  %v153 = vld [vmem:[%s2 + $0xa0] sm:$0xf]
  %v154 = vld [vmem:[%s2 + $0xa4] sm:$0xf]
  %v155 = vld [vmem:[%s2 + $0xa8] sm:$0xf]
  %v156 = vld [vmem:[%s2 + $0xac] sm:$0xf]
  %v157 = vld [vmem:[%s2 + $0xb0] sm:$0xf]
  %v158 = vld [vmem:[%s2 + $0xb4] sm:$0xf]
  %v159 = vld [vmem:[%s2 + $0xb8] sm:$0xf]
  %v160 = vld [vmem:[%s2 + $0xbc] sm:$0xf]
  %v161 = vld [vmem:[%s3] sm:$0x1]
  %v163 = vperm.slane %v161, 0
  %v213 = vunpack.c.l.b16 %v113
  %v214 = vunpack.c.l.b16 %v114
  %v215 = vunpack.c.l.b16 %v115
  %v216 = vunpack.c.l.b16 %v116
  %v217 = vunpack.c.l.b16 %v117
  %v218 = vunpack.c.l.b16 %v118
  %v219 = vunpack.c.l.b16 %v119
  %v220 = vunpack.c.l.b16 %v120
  %v221 = vunpack.c.l.b16 %v121
  %v222 = vunpack.c.l.b16 %v122
  %v223 = vunpack.c.l.b16 %v123
  %v224 = vunpack.c.l.b16 %v124
  %v225 = vunpack.c.l.b16 %v125
  %v226 = vunpack.c.l.b16 %v126
  %v227 = vunpack.c.l.b16 %v127
  %v228 = vunpack.c.l.b16 %v128
  %v229 = vunpack.c.l.b16 %v129
  %v230 = vunpack.c.l.b16 %v130
  %v231 = vunpack.c.l.b16 %v131
  %v232 = vunpack.c.l.b16 %v132
  %v233 = vunpack.c.l.b16 %v133
  %v234 = vunpack.c.l.b16 %v134
  %v235 = vunpack.c.l.b16 %v135
  %v236 = vunpack.c.l.b16 %v136
  %v237 = vunpack.c.l.b16 %v137
  %v238 = vunpack.c.l.b16 %v138
  %v239 = vunpack.c.l.b16 %v139
  %v240 = vunpack.c.l.b16 %v140
  %v241 = vunpack.c.l.b16 %v141
  %v242 = vunpack.c.l.b16 %v142
  %v243 = vunpack.c.l.b16 %v143
  %v244 = vunpack.c.l.b16 %v144
  %v245 = vunpack.c.l.b16 %v145
  %v246 = vunpack.c.l.b16 %v146
  %v247 = vunpack.c.l.b16 %v147
  %v248 = vunpack.c.l.b16 %v148
  %v249 = vunpack.c.l.b16 %v149
  %v250 = vunpack.c.l.b16 %v150
  %v251 = vunpack.c.l.b16 %v151
  %v252 = vunpack.c.l.b16 %v152
  %v253 = vunpack.c.l.b16 %v153
  %v254 = vunpack.c.l.b16 %v154
  %v255 = vunpack.c.l.b16 %v155
  %v256 = vunpack.c.l.b16 %v156
  %v257 = vunpack.c.l.b16 %v157
  %v258 = vunpack.c.l.b16 %v158
  %v259 = vunpack.c.l.b16 %v159
  %v260 = vunpack.c.l.b16 %v160
  %v261 = vpack.c.b16 %v214, %v213
  %v262 = vpack.c.b16 %v216, %v215
  %v263 = vpack.c.b16 %v218, %v217
  %v264 = vpack.c.b16 %v220, %v219
  %v265 = vpack.c.b16 %v222, %v221
  %v266 = vpack.c.b16 %v224, %v223
  %v267 = vpack.c.b16 %v226, %v225
  %v268 = vpack.c.b16 %v228, %v227
  %v269 = vpack.c.b16 %v230, %v229
  %v270 = vpack.c.b16 %v232, %v231
  %v271 = vpack.c.b16 %v234, %v233
  %v272 = vpack.c.b16 %v236, %v235
  %v273 = vpack.c.b16 %v238, %v237
  %v274 = vpack.c.b16 %v240, %v239
  %v275 = vpack.c.b16 %v242, %v241
  %v276 = vpack.c.b16 %v244, %v243
  %v277 = vpack.c.b16 %v246, %v245
  %v278 = vpack.c.b16 %v248, %v247
  %v279 = vpack.c.b16 %v250, %v249
  %v280 = vpack.c.b16 %v252, %v251
  %v281 = vpack.c.b16 %v254, %v253
  %v282 = vpack.c.b16 %v256, %v255
  %v283 = vpack.c.b16 %v258, %v257
  %v284 = vpack.c.b16 %v260, %v259
  %309 = vmatpush.bf16.msra.mxu0 %v268
  %310 = vmatpush.bf16.msra.mxu0 %v267
  %311 = vmatpush.bf16.msra.mxu0 %v266
  %312 = vmatpush.bf16.msra.mxu0 %v265
  %313 = vmatpush.bf16.msra.mxu0 %v264
  %314 = vmatpush.bf16.msra.mxu0 %v263
  %315 = vmatpush.bf16.msra.mxu0 %v262
  %316 = vmatpush.bf16.msra.mxu0 %v261
  %317 = vmatmul.bf16.gmra.mxu0 %v107
  %v318 = vpop.f32.mrf.mxu0
  %v319 = vadd.f32 %v163, %v318
  %v320 = vpop.f32.mrf.mxu0
  %v321 = vadd.f32 %v163, %v320
  %322 = vmatmul.bf16.gmra.mxu0 %v110
  %v323 = vpop.f32.mrf.mxu0
  %v324 = vadd.f32 %v163, %v323
  %v325 = vpop.f32.mrf.mxu0
  %v326 = vadd.f32 %v163, %v325
  %327 = vdwg.mxu0
  %328 = vmatpush.bf16.msra.mxu0 %v276
  %329 = vmatpush.bf16.msra.mxu0 %v275
  %330 = vmatpush.bf16.msra.mxu0 %v274
  %331 = vmatpush.bf16.msra.mxu0 %v273
  %332 = vmatpush.bf16.msra.mxu0 %v272
  %333 = vmatpush.bf16.msra.mxu0 %v271
  %334 = vmatpush.bf16.msra.mxu0 %v270
  %335 = vmatpush.bf16.msra.mxu0 %v269
  %336 = vmatmul.bf16.gmra.mxu0 %v108
  %v337 = vpop.f32.mrf.mxu0
  %v338 = vadd.f32 %v319, %v337
  %v339 = vpop.f32.mrf.mxu0
  %v340 = vadd.f32 %v321, %v339
  %341 = vmatmul.bf16.gmra.mxu0 %v111
  %v342 = vpop.f32.mrf.mxu0
  %v343 = vadd.f32 %v324, %v342
  %v344 = vpop.f32.mrf.mxu0
  %v345 = vadd.f32 %v326, %v344
  %346 = vdwg.mxu0
  %347 = vmatpush.bf16.msra.mxu0 %v284
  %348 = vmatpush.bf16.msra.mxu0 %v283
  %349 = vmatpush.bf16.msra.mxu0 %v282
  %350 = vmatpush.bf16.msra.mxu0 %v281
  %351 = vmatpush.bf16.msra.mxu0 %v280
  %352 = vmatpush.bf16.msra.mxu0 %v279
  %353 = vmatpush.bf16.msra.mxu0 %v278
  %354 = vmatpush.bf16.msra.mxu0 %v277
  %355 = vmatmul.bf16.gmra.mxu0 %v109
  %v356 = vpop.f32.mrf.mxu0
  %v357 = vadd.f32 %v338, %v356
  %v358 = vpop.f32.mrf.mxu0
  %v359 = vadd.f32 %v340, %v358
  %360 = vmatmul.bf16.gmra.mxu0 %v112
  %v361 = vpop.f32.mrf.mxu0
  %v362 = vadd.f32 %v343, %v361
  %v363 = vpop.f32.mrf.mxu0
  %v364 = vadd.f32 %v345, %v363
  %365 = vdwg.mxu0
  %v366 = vmax.f32 %v357, 0.0
  %v367 = vmax.f32 %v359, 0.0
  %v368 = vmax.f32 %v362, 0.0
  %v369 = vmax.f32 %v364, 0.0
  %v370 = vrot.slane %v366, 7
  %v371 = vrot.slane %v367, 7
  %v372 = vrot.slane %v368, 7
  %v373 = vrot.slane %v369, 7
  %v374 = vsel %vm45, %v372, %v373
  %v375 = vsel %vm45, %v371, %v372
  %v376 = vsel %vm45, %v370, %v371
  %v377 = vsel %vm45, %v373, %v370
  %v378 = vsel %vm66, 0.0, %v377
  %v379 = vsel %vm67, 0.0, %v376
  %v380 = vsel %vm68, 0.0, %v375
  %v381 = vsel %vm69, 0.0, %v374
  %v382 = vrot.slane %v366, 1
  %v383 = vrot.slane %v367, 1
  %v384 = vrot.slane %v368, 1
  %v385 = vrot.slane %v369, 1
  %v386 = vsel %vm78, %v384, %v385
  %v387 = vsel %vm78, %v383, %v384
  %v388 = vsel %vm78, %v382, %v383
  %v389 = vsel %vm78, %v385, %v382
  %v390 = vsel %vm99, 0.0, %v388
  %v391 = vsel %vm100, 0.0, %v387
  %v392 = vsel %vm101, 0.0, %v386
  %v393 = vsel %vm102, 0.0, %v389
  %v394 = vpack.c.bf16 %v379, %v378
  %v395 = vpack.c.bf16 %v367, %v366
  %v396 = vpack.c.bf16 %v391, %v390
  %v397 = vpack.c.bf16 %v381, %v380
  %v398 = vpack.c.bf16 %v369, %v368
  %v399 = vpack.c.bf16 %v393, %v392
  %v400 = vld [vmem:[%s4] sm:$0xf]
  %v401 = vld [vmem:[%s4 + $0x4] sm:$0xf]
  %v402 = vld [vmem:[%s4 + $0x8] sm:$0xf]
  %v403 = vld [vmem:[%s4 + $0xc] sm:$0xf]
  %v404 = vld [vmem:[%s4 + $0x10] sm:$0xf]
  %v405 = vld [vmem:[%s4 + $0x14] sm:$0xf]
  %v406 = vld [vmem:[%s4 + $0x18] sm:$0xf]
  %v407 = vld [vmem:[%s4 + $0x1c] sm:$0xf]
  %v408 = vld [vmem:[%s4 + $0x20] sm:$0xf]
  %v409 = vld [vmem:[%s4 + $0x24] sm:$0xf]
  %v410 = vld [vmem:[%s4 + $0x28] sm:$0xf]
  %v411 = vld [vmem:[%s4 + $0x2c] sm:$0xf]
  %v412 = vld [vmem:[%s4 + $0x30] sm:$0xf]
  %v413 = vld [vmem:[%s4 + $0x34] sm:$0xf]
  %v414 = vld [vmem:[%s4 + $0x38] sm:$0xf]
  %v415 = vld [vmem:[%s4 + $0x3c] sm:$0xf]
  %v416 = vld [vmem:[%s4 + $0x40] sm:$0xf]
  %v417 = vld [vmem:[%s4 + $0x44] sm:$0xf]
  %v418 = vld [vmem:[%s4 + $0x48] sm:$0xf]
  %v419 = vld [vmem:[%s4 + $0x4c] sm:$0xf]
  %v420 = vld [vmem:[%s4 + $0x50] sm:$0xf]
  %v421 = vld [vmem:[%s4 + $0x54] sm:$0xf]
  %v422 = vld [vmem:[%s4 + $0x58] sm:$0xf]
  %v423 = vld [vmem:[%s4 + $0x5c] sm:$0xf]
  %v424 = vld [vmem:[%s4 + $0x60] sm:$0xf]
  %v425 = vld [vmem:[%s4 + $0x64] sm:$0xf]
  %v426 = vld [vmem:[%s4 + $0x68] sm:$0xf]
  %v427 = vld [vmem:[%s4 + $0x6c] sm:$0xf]
  %v428 = vld [vmem:[%s4 + $0x70] sm:$0xf]
  %v429 = vld [vmem:[%s4 + $0x74] sm:$0xf]
  %v430 = vld [vmem:[%s4 + $0x78] sm:$0xf]
  %v431 = vld [vmem:[%s4 + $0x7c] sm:$0xf]
  %v432 = vld [vmem:[%s4 + $0x80] sm:$0xf]
  %v433 = vld [vmem:[%s4 + $0x84] sm:$0xf]
  %v434 = vld [vmem:[%s4 + $0x88] sm:$0xf]
  %v435 = vld [vmem:[%s4 + $0x8c] sm:$0xf]
  %v436 = vld [vmem:[%s4 + $0x90] sm:$0xf]
  %v437 = vld [vmem:[%s4 + $0x94] sm:$0xf]
  %v438 = vld [vmem:[%s4 + $0x98] sm:$0xf]
  %v439 = vld [vmem:[%s4 + $0x9c] sm:$0xf]
  %v440 = vld [vmem:[%s4 + $0xa0] sm:$0xf]
  %v441 = vld [vmem:[%s4 + $0xa4] sm:$0xf]
  %v442 = vld [vmem:[%s4 + $0xa8] sm:$0xf]
  %v443 = vld [vmem:[%s4 + $0xac] sm:$0xf]
  %v444 = vld [vmem:[%s4 + $0xb0] sm:$0xf]
  %v445 = vld [vmem:[%s4 + $0xb4] sm:$0xf]
  %v446 = vld [vmem:[%s4 + $0xb8] sm:$0xf]
  %v447 = vld [vmem:[%s4 + $0xbc] sm:$0xf]
  %v448 = vld [vmem:[%s5] sm:$0x1]
  %v450 = vperm.slane %v448, 0
  %v500 = vunpack.c.l.b16 %v400
  %v501 = vunpack.c.l.b16 %v401
  %v502 = vunpack.c.l.b16 %v402
  %v503 = vunpack.c.l.b16 %v403
  %v504 = vunpack.c.l.b16 %v404
  %v505 = vunpack.c.l.b16 %v405
  %v506 = vunpack.c.l.b16 %v406
  %v507 = vunpack.c.l.b16 %v407
  %v508 = vunpack.c.l.b16 %v408
  %v509 = vunpack.c.l.b16 %v409
  %v510 = vunpack.c.l.b16 %v410
  %v511 = vunpack.c.l.b16 %v411
  %v512 = vunpack.c.l.b16 %v412
  %v513 = vunpack.c.l.b16 %v413
  %v514 = vunpack.c.l.b16 %v414
  %v515 = vunpack.c.l.b16 %v415
  %v516 = vunpack.c.l.b16 %v416
  %v517 = vunpack.c.l.b16 %v417
  %v518 = vunpack.c.l.b16 %v418
  %v519 = vunpack.c.l.b16 %v419
  %v520 = vunpack.c.l.b16 %v420
  %v521 = vunpack.c.l.b16 %v421
  %v522 = vunpack.c.l.b16 %v422
  %v523 = vunpack.c.l.b16 %v423
  %v524 = vunpack.c.l.b16 %v424
  %v525 = vunpack.c.l.b16 %v425
  %v526 = vunpack.c.l.b16 %v426
  %v527 = vunpack.c.l.b16 %v427
  %v528 = vunpack.c.l.b16 %v428
  %v529 = vunpack.c.l.b16 %v429
  %v530 = vunpack.c.l.b16 %v430
  %v531 = vunpack.c.l.b16 %v431
  %v532 = vunpack.c.l.b16 %v432
  %v533 = vunpack.c.l.b16 %v433
  %v534 = vunpack.c.l.b16 %v434
  %v535 = vunpack.c.l.b16 %v435
  %v536 = vunpack.c.l.b16 %v436
  %v537 = vunpack.c.l.b16 %v437
  %v538 = vunpack.c.l.b16 %v438
  %v539 = vunpack.c.l.b16 %v439
  %v540 = vunpack.c.l.b16 %v440
  %v541 = vunpack.c.l.b16 %v441
  %v542 = vunpack.c.l.b16 %v442
  %v543 = vunpack.c.l.b16 %v443
  %v544 = vunpack.c.l.b16 %v444
  %v545 = vunpack.c.l.b16 %v445
  %v546 = vunpack.c.l.b16 %v446
  %v547 = vunpack.c.l.b16 %v447
  %v548 = vpack.c.b16 %v501, %v500
  %v549 = vpack.c.b16 %v503, %v502
  %v550 = vpack.c.b16 %v505, %v504
  %v551 = vpack.c.b16 %v507, %v506
  %v552 = vpack.c.b16 %v509, %v508
  %v553 = vpack.c.b16 %v511, %v510
  %v554 = vpack.c.b16 %v513, %v512
  %v555 = vpack.c.b16 %v515, %v514
  %v556 = vpack.c.b16 %v517, %v516
  %v557 = vpack.c.b16 %v519, %v518
  %v558 = vpack.c.b16 %v521, %v520
  %v559 = vpack.c.b16 %v523, %v522
  %v560 = vpack.c.b16 %v525, %v524
  %v561 = vpack.c.b16 %v527, %v526
  %v562 = vpack.c.b16 %v529, %v528
  %v563 = vpack.c.b16 %v531, %v530
  %v564 = vpack.c.b16 %v533, %v532
  %v565 = vpack.c.b16 %v535, %v534
  %v566 = vpack.c.b16 %v537, %v536
  %v567 = vpack.c.b16 %v539, %v538
  %v568 = vpack.c.b16 %v541, %v540
  %v569 = vpack.c.b16 %v543, %v542
  %v570 = vpack.c.b16 %v545, %v544
  %v571 = vpack.c.b16 %v547, %v546
  %596 = vmatpush.bf16.msra.mxu0 %v555
  %597 = vmatpush.bf16.msra.mxu0 %v554
  %598 = vmatpush.bf16.msra.mxu0 %v553
  %599 = vmatpush.bf16.msra.mxu0 %v552
  %600 = vmatpush.bf16.msra.mxu0 %v551
  %601 = vmatpush.bf16.msra.mxu0 %v550
  %602 = vmatpush.bf16.msra.mxu0 %v549
  %603 = vmatpush.bf16.msra.mxu0 %v548
  %604 = vmatmul.bf16.gmra.mxu0 %v394
  %v605 = vpop.f32.mrf.mxu0
  %v606 = vadd.f32 %v450, %v605
  %v607 = vpop.f32.mrf.mxu0
  %v608 = vadd.f32 %v450, %v607
  %609 = vmatmul.bf16.gmra.mxu0 %v397
  %v610 = vpop.f32.mrf.mxu0
  %v611 = vadd.f32 %v450, %v610
  %v612 = vpop.f32.mrf.mxu0
  %v613 = vadd.f32 %v450, %v612
  %614 = vdwg.mxu0
  %615 = vmatpush.bf16.msra.mxu0 %v563
  %616 = vmatpush.bf16.msra.mxu0 %v562
  %617 = vmatpush.bf16.msra.mxu0 %v561
  %618 = vmatpush.bf16.msra.mxu0 %v560
  %619 = vmatpush.bf16.msra.mxu0 %v559
  %620 = vmatpush.bf16.msra.mxu0 %v558
  %621 = vmatpush.bf16.msra.mxu0 %v557
  %622 = vmatpush.bf16.msra.mxu0 %v556
  %623 = vmatmul.bf16.gmra.mxu0 %v395
  %v624 = vpop.f32.mrf.mxu0
  %v625 = vadd.f32 %v606, %v624
  %v626 = vpop.f32.mrf.mxu0
  %v627 = vadd.f32 %v608, %v626
  %628 = vmatmul.bf16.gmra.mxu0 %v398
  %v629 = vpop.f32.mrf.mxu0
  %v630 = vadd.f32 %v611, %v629
  %v631 = vpop.f32.mrf.mxu0
  %v632 = vadd.f32 %v613, %v631
  %633 = vdwg.mxu0
  %634 = vmatpush.bf16.msra.mxu0 %v571
  %635 = vmatpush.bf16.msra.mxu0 %v570
  %636 = vmatpush.bf16.msra.mxu0 %v569
  %637 = vmatpush.bf16.msra.mxu0 %v568
  %638 = vmatpush.bf16.msra.mxu0 %v567
  %639 = vmatpush.bf16.msra.mxu0 %v566
  %640 = vmatpush.bf16.msra.mxu0 %v565
  %641 = vmatpush.bf16.msra.mxu0 %v564
  %642 = vmatmul.bf16.gmra.mxu0 %v396
  %v643 = vpop.f32.mrf.mxu0
  %v644 = vadd.f32 %v625, %v643
  %v645 = vpop.f32.mrf.mxu0
  %v646 = vadd.f32 %v627, %v645
  %647 = vmatmul.bf16.gmra.mxu0 %v399
  %v648 = vpop.f32.mrf.mxu0
  %v649 = vadd.f32 %v630, %v648
  %v650 = vpop.f32.mrf.mxu0
  %v651 = vadd.f32 %v632, %v650
  %652 = vdwg.mxu0
  %v653 = vadd.f32 %v644, %v23
  %v654 = vadd.f32 %v646, %v24
  %v655 = vadd.f32 %v649, %v25
  %v656 = vadd.f32 %v651, %v26
  %v657 = vmax.f32 %v653, 0.0
  %v658 = vmax.f32 %v654, 0.0
  %v659 = vmax.f32 %v655, 0.0
  %v660 = vmax.f32 %v656, 0.0
  %661 = vst [vmem:[%s6] sm:$0xff] %v657
  %662 = vst [vmem:[%s6 + $0x8] sm:$0xff] %v658
  %663 = vst [vmem:[%s6 + $0x10] sm:$0xff] %v659
  %664 = vst [vmem:[%s6 + $0x18] sm:$0xff] %v660
  // Predicated region
  $region26: #{basic_block_forward.1} parent=0 // pred_check
    _
  $region27: #{basic_block_forward.1} parent=0 // pred_check_branch
    %666 = sbr.rel (0) target = $region29
  $region28: #{basic_block_forward.1} parent=0 // pred_region
    _
  $region29: #{basic_block_forward.1} parent=0 // pred_fallthru
    _
  // Predicated region
  $region30: #{basic_block_forward.1} parent=0 // pred_check
    _
  $region31: #{basic_block_forward.1} parent=0 // pred_check_branch
    %668 = sbr.rel (0) target = $region33
  $region32: #{basic_block_forward.1} parent=0 // pred_region
    _
  $region33: #{basic_block_forward.1} parent=0 // pred_fallthru
    _

</llo_original>
